<compile_context>
chip_gen: v7x
topology: tpu7x:2x2x1
jax: 0.10.0
libtpu: 0.0.40
codegen_flags: <defaults>
</compile_context>

<pallas_src>
import functools

import jax
import jax.numpy as jnp
from jax.experimental import pallas as pl
from jax.experimental.pallas import tpu as pltpu

_LANE = 128   # MXU-friendly width for the padded final layer
_OUT_W = 8    # narrow output block width actually written to HBM (col 0 is real)


def _cdiv(a, b):
    return -(-a // b)


def _round_up(x, m):
    return _cdiv(x, m) * m


def _discriminator_kernel(n_layers, x_ref, *refs):
    """Fused MLP over one (tile, pacdim) row tile.

    refs = (w0, b0, w1, b1, ..., w_last (padded to 128 cols), b_last, o_ref)
    """
    o_ref = refs[-1]
    param_refs = refs[:-1]

    # In-kernel downcast: x travels HBM->VMEM as f32; cast on the VPU here.
    h = x_ref[...].astype(jnp.bfloat16)          # bf16 (tile, pacdim)
    for li in range(n_layers):
        w = param_refs[2 * li][...]              # bf16 (in, out)
        b = param_refs[2 * li + 1][...]          # f32  (1, out)
        acc = jnp.dot(h, w, preferred_element_type=jnp.float32) + b
        if li < n_layers - 1:
            # LeakyReLU(negative_slope=0.2): one mul + one max (slope < 1, so
            # identical to the where() formulation).
            acc = jnp.maximum(acc, 0.2 * acc)
            # TODO(synk): Dropout(0.5) is eval-mode identity here; train-mode
            # stochastic masking (pltpu.prng_random_bits) not implemented.
            h = acc.astype(jnp.bfloat16)         # bf16 feed for next MXU pass
        else:
            # Keep only the first _OUT_W lanes of the 128-wide padded pass and
            # apply an exact sigmoid on that narrow slice.
            z = acc[:, :o_ref.shape[1]]
            o_ref[...] = (1.0 / (1.0 + jnp.exp(-z))).astype(o_ref.dtype)


def init_discriminator_params(key, input_dim, discriminator_dim, pac=1,
                              dtype=jnp.float32):
    """Deterministic parameter init (shapes match the torch.nn.Linear stack)."""
    dims = [input_dim * pac] + list(discriminator_dim) + [1]
    params = []
    for li in range(len(dims) - 1):
        key, kw, kb = jax.random.split(key, 3)
        fan_in, fan_out = dims[li], dims[li + 1]
        bound = 1.0 / jnp.sqrt(jnp.float32(fan_in))
        # Stored already transposed: (in_features, out_features).
        w = jax.random.uniform(kw, (fan_in, fan_out), dtype, -bound, bound)
        b = jax.random.uniform(kb, (1, fan_out), dtype, -bound, bound)
        params.append((w, b))
    return params


def discriminator_forward(input_, params, pac=1, tile_m=2048):
    """Apply the Discriminator. input_ is (B, input_dim) with B % pac == 0."""
    assert input_.shape[0] % pac == 0
    pacdim = input_.shape[1] * pac
    x = input_.reshape(-1, pacdim)               # == input_.view(-1, self.pacdim)
    rows = x.shape[0]
    out_dtype = x.dtype

    # Adaptive row tile:
    #   * small batches: tile shrinks to the 8-rounded row count (no wasted
    #     MXU/VPU work or HBM traffic on throwaway padded rows),
    #   * rows >= 512: force >= 2 grid steps so v7x's 2 TensorCores both work,
    #   * large batches: cap at tile_m to amortize per-step overhead.
    n_steps = max(1, _cdiv(rows, tile_m))
    if rows >= 512:
        n_steps = max(n_steps, 2)
    tile = _round_up(_cdiv(rows, n_steps), 8)
    rows_padded = _round_up(rows, tile)
    if rows_padded != rows:
        x = jnp.pad(x, ((0, rows_padded - rows), (0, 0)))

    n_layers = len(params)
    flat_params = []
    for li, (w, b) in enumerate(params):
        w = w.astype(jnp.bfloat16)               # MXU-native; cast once here
        b = b.astype(jnp.float32)
        if li == n_layers - 1:
            # Pad the degenerate N=1 final layer to a 128-wide MXU pass; only
            # the first _OUT_W lanes ever reach HBM (see kernel store).
            w = jnp.pad(w, ((0, 0), (0, _LANE - w.shape[1])))
            b = jnp.pad(b, ((0, 0), (0, _LANE - b.shape[1])))
        flat_params.extend([w, b])

    kernel = functools.partial(_discriminator_kernel, n_layers)

    grid = (rows_padded // tile,)
    in_specs = [pl.BlockSpec((tile, pacdim), lambda i: (i, 0))]
    for p in flat_params:
        # Grid-invariant index_map -> weights/biases stay resident in VMEM.
        in_specs.append(pl.BlockSpec(tuple(p.shape), lambda i: (0, 0)))
    out_specs = pl.BlockSpec((tile, _OUT_W), lambda i: (i, 0))

    out = pl.pallas_call(
        kernel,
        out_shape=jax.ShapeDtypeStruct((rows_padded, _OUT_W), jnp.float32),
        grid=grid,
        in_specs=in_specs,
        out_specs=out_specs,
        compiler_params=pltpu.CompilerParams(
            dimension_semantics=("parallel",),   # shard row tiles on v7x's 2 TCs
            vmem_limit_bytes=32 * 1024 * 1024,   # explicit; safe on v5e/v6e/v7x
        ),
    )(x, *flat_params)

    # Column 0 holds the real Linear(dim, 1) output; drop padded rows/lanes.
    return out[:rows, :1].astype(out_dtype)


def _reference_forward(input_, params, pac=1):
    """Pure-JAX reference (eval-mode dropout) for correctness check."""
    x = input_.reshape(-1, input_.shape[1] * pac).astype(jnp.float32)
    for li, (w, b) in enumerate(params):
        x = x @ w.astype(jnp.float32) + b.astype(jnp.float32)
        if li < len(params) - 1:
            x = jnp.where(x > 0, x, 0.2 * x)
        else:
            x = jax.nn.sigmoid(x)
    return x


if __name__ == "__main__":
    key = jax.random.PRNGKey(0)
    k_in, k_param, k_in2 = jax.random.split(key, 3)

    # Small, module-consistent shapes.
    batch = 8
    input_dim = 16
    discriminator_dim = (32, 32)
    pac = 2

    x = jax.random.normal(k_in, (batch, input_dim), jnp.float32)
    params = init_discriminator_params(k_param, input_dim, discriminator_dim,
                                       pac=pac)

    out = jax.block_until_ready(discriminator_forward(x, params, pac=pac))
    ref = _reference_forward(x, params, pac=pac)
    assert out.shape == (batch // pac, 1), out.shape
    # bf16 matmuls -> loosened tolerance vs the f32 reference.
    assert jnp.allclose(out, ref, atol=2e-2, rtol=2e-2), (out, ref)

    # Second check: enough rows for multiple grid steps (exercises pipelining
    # and the >=2-step split for v7x's two TensorCores).
    batch2 = 2048
    x2 = jax.random.normal(k_in2, (batch2, input_dim), jnp.float32)
    out2 = jax.block_until_ready(discriminator_forward(x2, params, pac=pac))
    ref2 = _reference_forward(x2, params, pac=pac)
    assert out2.shape == (batch2 // pac, 1), out2.shape
    assert jnp.allclose(out2, ref2, atol=2e-2, rtol=2e-2)

    print("KERNEL_OK")
</pallas_src>

<mosaic_0001>
module attributes {stable_mosaic.version = 11 : i64} {
  func.func @_discriminator_kernel(%arg0: i32, %arg1: memref<8x32xf32, #tpu.memory_space<vmem>>, %arg2: memref<32x32xbf16, #tpu.memory_space<vmem>>, %arg3: memref<1x32xf32, #tpu.memory_space<vmem>>, %arg4: memref<32x32xbf16, #tpu.memory_space<vmem>>, %arg5: memref<1x32xf32, #tpu.memory_space<vmem>>, %arg6: memref<32x128xbf16, #tpu.memory_space<vmem>>, %arg7: memref<1x128xf32, #tpu.memory_space<vmem>>, %arg8: memref<8x8xf32, #tpu.memory_space<vmem>>) attributes {dimension_semantics = [#tpu.dimension_semantics<parallel>], iteration_bounds = array<i64: 1>, scalar_prefetch = 0 : i64, scratch_operands = 0 : i64, tpu.core_type = #tpu.core_type<tc>, window_params = [{transform_indices = @transform_0, window_bounds = array<i64: 8, 32>}, {pipeline_mode = #tpu.pipeline_mode<synchronous>, transform_indices = @transform_1, window_bounds = array<i64: 32, 32>}, {pipeline_mode = #tpu.pipeline_mode<synchronous>, transform_indices = @transform_2, window_bounds = array<i64: 1, 32>}, {pipeline_mode = #tpu.pipeline_mode<synchronous>, transform_indices = @transform_3, window_bounds = array<i64: 32, 32>}, {pipeline_mode = #tpu.pipeline_mode<synchronous>, transform_indices = @transform_4, window_bounds = array<i64: 1, 32>}, {pipeline_mode = #tpu.pipeline_mode<synchronous>, transform_indices = @transform_5, window_bounds = array<i64: 32, 128>}, {pipeline_mode = #tpu.pipeline_mode<synchronous>, transform_indices = @transform_6, window_bounds = array<i64: 1, 128>}, {transform_indices = @transform_7, window_bounds = array<i64: 8, 8>}]} {
    %c0 = arith.constant 0 : index
    %c0_0 = arith.constant 0 : index
    %0 = vector.load %arg1[%c0, %c0_0] : memref<8x32xf32, #tpu.memory_space<vmem>>, vector<8x32xf32>
    %1 = arith.truncf %0 : vector<8x32xf32> to vector<8x32xbf16>
    %c0_1 = arith.constant 0 : index
    %c0_2 = arith.constant 0 : index
    %2 = vector.load %arg2[%c0_1, %c0_2] : memref<32x32xbf16, #tpu.memory_space<vmem>>, vector<32x32xbf16>
    %c0_3 = arith.constant 0 : index
    %c0_4 = arith.constant 0 : index
    %3 = vector.load %arg3[%c0_3, %c0_4] : memref<1x32xf32, #tpu.memory_space<vmem>>, vector<1x32xf32>
    %cst = arith.constant dense<0.000000e+00> : vector<8x32xf32>
    %4 = tpu.matmul %1, %2, %cst {dimension_numbers = #tpu.dot_dimension_numbers<[1], [0], [0], [1], [0, 0, 1, 1], [], []>} : vector<8x32xbf16>, vector<32x32xbf16>, vector<8x32xf32> -> vector<8x32xf32>
    %5 = vector.broadcast %3 : vector<1x32xf32> to vector<8x32xf32>
    %6 = arith.addf %4, %5 : vector<8x32xf32>
    %cst_5 = arith.constant 2.000000e-01 : f32
    %7 = vector.broadcast %cst_5 : f32 to vector<8x32xf32>
    %8 = arith.mulf %7, %6 : vector<8x32xf32>
    %9 = arith.maximumf %6, %8 : vector<8x32xf32>
    %10 = arith.truncf %9 : vector<8x32xf32> to vector<8x32xbf16>
    %c0_6 = arith.constant 0 : index
    %c0_7 = arith.constant 0 : index
    %11 = vector.load %arg4[%c0_6, %c0_7] : memref<32x32xbf16, #tpu.memory_space<vmem>>, vector<32x32xbf16>
    %c0_8 = arith.constant 0 : index
    %c0_9 = arith.constant 0 : index
    %12 = vector.load %arg5[%c0_8, %c0_9] : memref<1x32xf32, #tpu.memory_space<vmem>>, vector<1x32xf32>
    %cst_10 = arith.constant dense<0.000000e+00> : vector<8x32xf32>
    %13 = tpu.matmul %10, %11, %cst_10 {dimension_numbers = #tpu.dot_dimension_numbers<[1], [0], [0], [1], [0, 0, 1, 1], [], []>} : vector<8x32xbf16>, vector<32x32xbf16>, vector<8x32xf32> -> vector<8x32xf32>
    %14 = vector.broadcast %12 : vector<1x32xf32> to vector<8x32xf32>
    %15 = arith.addf %13, %14 : vector<8x32xf32>
    %cst_11 = arith.constant 2.000000e-01 : f32
    %16 = vector.broadcast %cst_11 : f32 to vector<8x32xf32>
    %17 = arith.mulf %16, %15 : vector<8x32xf32>
    %18 = arith.maximumf %15, %17 : vector<8x32xf32>
    %19 = arith.truncf %18 : vector<8x32xf32> to vector<8x32xbf16>
    %c0_12 = arith.constant 0 : index
    %c0_13 = arith.constant 0 : index
    %20 = vector.load %arg6[%c0_12, %c0_13] : memref<32x128xbf16, #tpu.memory_space<vmem>>, vector<32x128xbf16>
    %c0_14 = arith.constant 0 : index
    %c0_15 = arith.constant 0 : index
    %21 = vector.load %arg7[%c0_14, %c0_15] : memref<1x128xf32, #tpu.memory_space<vmem>>, vector<1x128xf32>
    %cst_16 = arith.constant dense<0.000000e+00> : vector<8x128xf32>
    %22 = tpu.matmul %19, %20, %cst_16 {dimension_numbers = #tpu.dot_dimension_numbers<[1], [0], [0], [1], [0, 0, 1, 1], [], []>} : vector<8x32xbf16>, vector<32x128xbf16>, vector<8x128xf32> -> vector<8x128xf32>
    %23 = vector.broadcast %21 : vector<1x128xf32> to vector<8x128xf32>
    %24 = arith.addf %22, %23 : vector<8x128xf32>
    %25 = vector.extract_strided_slice %24 {offsets = [0, 0], sizes = [8, 8], strides = [1, 1]} : vector<8x128xf32> to vector<8x8xf32>
    %cst_17 = arith.constant 0.000000e+00 : f32
    %26 = vector.broadcast %cst_17 : f32 to vector<8x8xf32>
    %27 = arith.subf %26, %25 : vector<8x8xf32>
    %28 = math.exp %27 : vector<8x8xf32>
    %cst_18 = arith.constant 1.000000e+00 : f32
    %29 = vector.broadcast %cst_18 : f32 to vector<8x8xf32>
    %30 = arith.addf %29, %28 : vector<8x8xf32>
    %cst_19 = arith.constant 1.000000e+00 : f32
    %31 = vector.broadcast %cst_19 : f32 to vector<8x8xf32>
    %32 = arith.divf %31, %30 : vector<8x8xf32>
    %c0_20 = arith.constant 0 : index
    %c0_21 = arith.constant 0 : index
    %33 = vector.load %arg8[%c0_20, %c0_21] : memref<8x8xf32, #tpu.memory_space<vmem>>, vector<8x8xf32>
    tpu.vector_store %arg8[%c0_20, %c0_21], %32 {strides = array<i32>} : memref<8x8xf32, #tpu.memory_space<vmem>>, vector<8x8xf32>,
    return
  }
  func.func @transform_0(%arg0: i32) -> (i32, i32) {
    %c0_i32 = arith.constant 0 : i32
    %c0_i32_0 = arith.constant 0 : i32
    return %arg0, %c0_i32 : i32, i32
  }
  func.func @transform_1(%arg0: i32) -> (i32, i32) {
    %c0_i32 = arith.constant 0 : i32
    %c0_i32_0 = arith.constant 0 : i32
    %c0_i32_1 = arith.constant 0 : i32
    return %c0_i32, %c0_i32_0 : i32, i32
  }
  func.func @transform_2(%arg0: i32) -> (i32, i32) {
    %c0_i32 = arith.constant 0 : i32
    %c0_i32_0 = arith.constant 0 : i32
    %c0_i32_1 = arith.constant 0 : i32
    return %c0_i32, %c0_i32_0 : i32, i32
  }
  func.func @transform_3(%arg0: i32) -> (i32, i32) {
    %c0_i32 = arith.constant 0 : i32
    %c0_i32_0 = arith.constant 0 : i32
    %c0_i32_1 = arith.constant 0 : i32
    return %c0_i32, %c0_i32_0 : i32, i32
  }
  func.func @transform_4(%arg0: i32) -> (i32, i32) {
    %c0_i32 = arith.constant 0 : i32
    %c0_i32_0 = arith.constant 0 : i32
    %c0_i32_1 = arith.constant 0 : i32
    return %c0_i32, %c0_i32_0 : i32, i32
  }
  func.func @transform_5(%arg0: i32) -> (i32, i32) {
    %c0_i32 = arith.constant 0 : i32
    %c0_i32_0 = arith.constant 0 : i32
    %c0_i32_1 = arith.constant 0 : i32
    return %c0_i32, %c0_i32_0 : i32, i32
  }
  func.func @transform_6(%arg0: i32) -> (i32, i32) {
    %c0_i32 = arith.constant 0 : i32
    %c0_i32_0 = arith.constant 0 : i32
    %c0_i32_1 = arith.constant 0 : i32
    return %c0_i32, %c0_i32_0 : i32, i32
  }
  func.func @transform_7(%arg0: i32) -> (i32, i32) {
    %c0_i32 = arith.constant 0 : i32
    %c0_i32_0 = arith.constant 0 : i32
    return %arg0, %c0_i32 : i32, i32
  }
}

</mosaic_0001>

<llo_original>
// kernel: tpu_custom_call.1
$region0: #{tpu_custom_call.1}
  #allocation0 [shape = 'u32[]', space=smem, size = 0x4, offset = 0x4, fixed_abs, tag = 'smem constant byte address 0x4 - core index']
  #allocation1 [shape = 'u32[144,128]{1,0:T(1,128)}', space=vmem, size = 0x12000, scoped, tag = 'internal scratch']
  %s0 = inlined_call_operand.hbm [shape: f32[8,32], index: 0, kind: input, shape index: {}]
  %s1 = inlined_call_operand.hbm [shape: bf16[32,32], index: 1, kind: input, shape index: {}]
  %s2 = inlined_call_operand.vmem [shape: f32[1,32], index: 2, kind: input, shape index: {}]
  %s3 = inlined_call_operand.hbm [shape: bf16[32,32], index: 3, kind: input, shape index: {}]
  %s4 = inlined_call_operand.vmem [shape: f32[1,32], index: 4, kind: input, shape index: {}]
  %s5 = inlined_call_operand.vmem [shape: bf16[32,128], index: 5, kind: input, shape index: {}]
  %s6 = inlined_call_operand.vmem [shape: f32[1,128], index: 6, kind: input, shape index: {}]
  %s7 = inlined_call_operand.hbm [shape: f32[8,8], index: 7, kind: output, shape index: {}]
  %s8 = sld [smem:[#allocation0]]
  $region50: #{tpu_custom_call.1} parent=0
    _
  %s10 = ssub.s32 1, %s8
  %s11 = scalar_select 0, %s10, %s8
  $region1: #{tpu_custom_call.1} parent=0
    #allocation2 [shape = 'u8[4096]{0}', space=vmem, size = 0x1000, scoped, tag = 'input window, operand 0, single buffered']
    #allocation3 [shape = 's32[1]{0}', space=sflag, size = 0x4, scoped, tag = 'scoped memory for tpu_custom_call.1']
    #allocation4 [shape = 's32[1]{0}', space=sflag, size = 0x4, scoped, tag = 'scoped memory for tpu_custom_call.1']
    #allocation5 [shape = 'u8[8192]{0}', space=vmem, size = 0x2000, scoped, tag = 'input window, operand 1, single buffered']
    #allocation6 [shape = 's32[1]{0}', space=sflag, size = 0x4, scoped, tag = 'scoped memory for tpu_custom_call.1']
    #allocation7 [shape = 'u8[8192]{0}', space=vmem, size = 0x2000, scoped, tag = 'input window, operand 3, single buffered']
    #allocation8 [shape = 'u8[4096]{0}', space=vmem, size = 0x1000, scoped, tag = 'output window, operand 0, single buffered']
    %12 = vsyncpa [#allocation3], 0
    %13 = vsyncpa [#allocation6], 0
    %14 = vsyncpa [#allocation4], 0
    // Predicated region
    $region2: #{tpu_custom_call.1} parent=1 // pred_check
      _
    $region3: #{tpu_custom_call.1} parent=1 // pred_check_branch
      %16 = sbr.rel (0) target = $region5
    $region4: #{tpu_custom_call.1} parent=1 // pred_region
      %s18 = ssub.s32 128, 128
      %19 = vsyncadd [#allocation3], %s18
      %s21 = sshll.u32 [#allocation2], 4
      %s22 = int_to_ptr.vmem [resolvable:$true] %s21
      %24 = dma.hbm_to_vmem [thread:$0]  %s0, 128, %s22, [#allocation3]
    $region5: #{tpu_custom_call.1} parent=1 // pred_fallthru
      _
    // Predicated region
    $region6: #{tpu_custom_call.1} parent=1 // pred_check
      _
    $region7: #{tpu_custom_call.1} parent=1 // pred_check_branch
      %26 = sbr.rel (0) target = $region9
    $region8: #{tpu_custom_call.1} parent=1 // pred_region
      %s28 = ssub.s32 256, 256
      %29 = vsyncadd [#allocation6], %s28
      %s30 = sshll.u32 [#allocation5], 4
      %s31 = int_to_ptr.vmem [resolvable:$true] %s30
      %36 = dma.hbm_to_vmem [thread:$0]  %s1, 256, %s31, [#allocation6], 64, 64, 4
    $region9: #{tpu_custom_call.1} parent=1 // pred_fallthru
      _
    // Predicated region
    $region10: #{tpu_custom_call.1} parent=1 // pred_check
      _
    $region11: #{tpu_custom_call.1} parent=1 // pred_check_branch
      %38 = sbr.rel (0) target = $region13
    $region12: #{tpu_custom_call.1} parent=1 // pred_region
      _
    $region13: #{tpu_custom_call.1} parent=1 // pred_fallthru
      _
    // Predicated region
    $region14: #{tpu_custom_call.1} parent=1 // pred_check
      _
    $region15: #{tpu_custom_call.1} parent=1 // pred_check_branch
      %40 = sbr.rel (0) target = $region17
    $region16: #{tpu_custom_call.1} parent=1 // pred_region
      %s42 = ssub.s32 256, 256
      %43 = vsyncadd [#allocation6], %s42
      %s44 = sshll.u32 [#allocation7], 4
      %s45 = int_to_ptr.vmem [resolvable:$true] %s44
      %50 = dma.hbm_to_vmem [thread:$0]  %s3, 256, %s45, [#allocation6], 64, 64, 4
    $region17: #{tpu_custom_call.1} parent=1 // pred_fallthru
      _
    // Predicated region
    $region18: #{tpu_custom_call.1} parent=1 // pred_check
      _
    $region19: #{tpu_custom_call.1} parent=1 // pred_check_branch
      %52 = sbr.rel (0) target = $region21
    $region20: #{tpu_custom_call.1} parent=1 // pred_region
      _
    $region21: #{tpu_custom_call.1} parent=1 // pred_fallthru
      _
    // Predicated region
    $region22: #{tpu_custom_call.1} parent=1 // pred_check
      _
    $region23: #{tpu_custom_call.1} parent=1 // pred_check_branch
      %54 = sbr.rel (0) target = $region25
    $region24: #{tpu_custom_call.1} parent=1 // pred_region
      _
    $region25: #{tpu_custom_call.1} parent=1 // pred_fallthru
      _
    // Predicated region
    $region26: #{tpu_custom_call.1} parent=1 // pred_check
      _
    $region27: #{tpu_custom_call.1} parent=1 // pred_check_branch
      %56 = sbr.rel (0) target = $region29
    $region28: #{tpu_custom_call.1} parent=1 // pred_region
      _
    $region29: #{tpu_custom_call.1} parent=1 // pred_fallthru
      _
    // Predicated region
    $region30: #{tpu_custom_call.1} parent=1 // pred_check
      _
    $region31: #{tpu_custom_call.1} parent=1 // pred_check_branch
      %58 = sbr.rel (0) target = $region33
    $region32: #{tpu_custom_call.1} parent=1 // pred_region
      %59 = dma.done [#allocation3], 128
    $region33: #{tpu_custom_call.1} parent=1 // pred_fallthru
      _
    // Predicated region
    $region34: #{tpu_custom_call.1} parent=1 // pred_check
      _
    $region35: #{tpu_custom_call.1} parent=1 // pred_check_branch
      %61 = sbr.rel (0) target = $region37
    $region36: #{tpu_custom_call.1} parent=1 // pred_region
      %62 = dma.done [#allocation6], 256
    $region37: #{tpu_custom_call.1} parent=1 // pred_fallthru
      _
    // Predicated region
    $region38: #{tpu_custom_call.1} parent=1 // pred_check
      _
    $region39: #{tpu_custom_call.1} parent=1 // pred_check_branch
      %64 = sbr.rel (0) target = $region41
    $region40: #{tpu_custom_call.1} parent=1 // pred_region
      %65 = dma.done [#allocation6], 256
    $region41: #{tpu_custom_call.1} parent=1 // pred_fallthru
      _
    %v67 = vld [vmem:[#allocation2] sm:$0xff]
    %v68 = vpack.c.bf16 %v67, %v67
    %v69 = vld [vmem:[#allocation5] sm:$0xf]
    %v70 = vld [vmem:[#allocation5 + $0x4] sm:$0xf]
    %v71 = vld [vmem:[#allocation5 + $0x8] sm:$0xf]
    %v72 = vld [vmem:[#allocation5 + $0xc] sm:$0xf]
    %v73 = vld [vmem:[%s2] sm:$0x1]
    %v75 = vlaneseq
    %v76 = vshrl.u32 %v75, 7
    %v77 = vsub.s32 0, %v76
    %v78 = vrot.slane %v73, %v77
    %v84 = vunpack.c.l.b16 %v69
    %v85 = vunpack.c.l.b16 %v70
    %v86 = vunpack.c.l.b16 %v71
    %v87 = vunpack.c.l.b16 %v72
    %v88 = vpack.c.b16 %v85, %v84
    %v89 = vpack.c.b16 %v87, %v86
    %vm92 = vcmask 261120
    %v94 = vsel %vm92, %v68, 0
    %96 = vmatprep.subr.bf16.mxu0 0
    %97 = vmatpush1.bf16.msra.mxu0 %v88
    %98 = vmatprep.subr.bf16.mxu0 0
    %99 = vmatpush1.bf16.msra.mxu0 %v89
    %100 = vmatprep.subr.bf16.mxu0 0
    %101 = vmatpush1.bf16.msra.mxu0 0
    %102 = vmatprep.subr.bf16.mxu0 0
    %103 = vmatpush1.bf16.msra.mxu0 0
    %104 = vmatprep.subr.bf16.mxu0 0
    %105 = vmatpush1.bf16.msra.mxu0 0
    %106 = vmatprep.subr.bf16.mxu0 0
    %107 = vmatpush1.bf16.msra.mxu0 0
    %108 = vmatprep.subr.bf16.mxu0 0
    %109 = vmatpush1.bf16.msra.mxu0 0
    %110 = vmatprep.subr.bf16.mxu0 0
    %111 = vmatpush1.bf16.msra.mxu0 0
    %112 = vmatprep.subr.bf16.mxu0 0
    %113 = vmatpush1.bf16.msra.mxu0 0
    %114 = vmatprep.subr.bf16.mxu0 0
    %115 = vmatpush1.bf16.msra.mxu0 0
    %116 = vmatprep.subr.bf16.mxu0 0
    %117 = vmatpush1.bf16.msra.mxu0 0
    %118 = vmatprep.subr.bf16.mxu0 0
    %119 = vmatpush1.bf16.msra.mxu0 0
    %120 = vmatprep.subr.bf16.mxu0 0
    %121 = vmatpush1.bf16.msra.mxu0 0
    %122 = vmatprep.subr.bf16.mxu0 0
    %123 = vmatpush1.bf16.msra.mxu0 0
    %124 = vmatprep.subr.bf16.mxu0 0
    %125 = vmatpush1.bf16.msra.mxu0 0
    %126 = vmatprep.subr.bf16.mxu0 0
    %127 = vmatpush1.bf16.msra.mxu0 0
    %128 = vmatprep.mubr.bf16.mxu0 0
    %129 = vmatmul.mubr.bf16.gmra.mrb[0].mxu0 %v94
    %v130 = vpop.f32.mrb[0].mxu0
    %v131 = vadd.f32 %v78, %v130
    %v132 = vpop.f32.mrb[0].mxu0
    %v133 = vpop.f32.mrb[0].mxu0
    %v134 = vpop.f32.mrb[0].mxu0
    %135 = vdwg.mxu0
    %v136 = vmul.f32 %v131, 0.2
    %v137 = vmax.f32 %v131, %v136
    %v138 = vpack.c.bf16 %v137, %v137
    %v139 = vld [vmem:[#allocation7] sm:$0xf]
    %v140 = vld [vmem:[#allocation7 + $0x4] sm:$0xf]
    %v141 = vld [vmem:[#allocation7 + $0x8] sm:$0xf]
    %v142 = vld [vmem:[#allocation7 + $0xc] sm:$0xf]
    %v143 = vld [vmem:[%s4] sm:$0x1]
    %v145 = vlaneseq
    %v146 = vshrl.u32 %v145, 7
    %v147 = vsub.s32 0, %v146
    %v148 = vrot.slane %v143, %v147
    %v154 = vunpack.c.l.b16 %v139
    %v155 = vunpack.c.l.b16 %v140
    %v156 = vunpack.c.l.b16 %v141
    %v157 = vunpack.c.l.b16 %v142
    %v158 = vpack.c.b16 %v155, %v154
    %v159 = vpack.c.b16 %v157, %v156
    %v163 = vsel %vm92, %v138, 0
    %165 = vmatprep.subr.bf16.mxu0 0
    %166 = vmatpush1.bf16.msra.mxu0 %v158
    %167 = vmatprep.subr.bf16.mxu0 0
    %168 = vmatpush1.bf16.msra.mxu0 %v159
    %169 = vmatprep.subr.bf16.mxu0 0
    %170 = vmatpush1.bf16.msra.mxu0 0
    %171 = vmatprep.subr.bf16.mxu0 0
    %172 = vmatpush1.bf16.msra.mxu0 0
    %173 = vmatprep.subr.bf16.mxu0 0
    %174 = vmatpush1.bf16.msra.mxu0 0
    %175 = vmatprep.subr.bf16.mxu0 0
    %176 = vmatpush1.bf16.msra.mxu0 0
    %177 = vmatprep.subr.bf16.mxu0 0
    %178 = vmatpush1.bf16.msra.mxu0 0
    %179 = vmatprep.subr.bf16.mxu0 0
    %180 = vmatpush1.bf16.msra.mxu0 0
    %181 = vmatprep.subr.bf16.mxu0 0
    %182 = vmatpush1.bf16.msra.mxu0 0
    %183 = vmatprep.subr.bf16.mxu0 0
    %184 = vmatpush1.bf16.msra.mxu0 0
    %185 = vmatprep.subr.bf16.mxu0 0
    %186 = vmatpush1.bf16.msra.mxu0 0
    %187 = vmatprep.subr.bf16.mxu0 0
    %188 = vmatpush1.bf16.msra.mxu0 0
    %189 = vmatprep.subr.bf16.mxu0 0
    %190 = vmatpush1.bf16.msra.mxu0 0
    %191 = vmatprep.subr.bf16.mxu0 0
    %192 = vmatpush1.bf16.msra.mxu0 0
    %193 = vmatprep.subr.bf16.mxu0 0
    %194 = vmatpush1.bf16.msra.mxu0 0
    %195 = vmatprep.subr.bf16.mxu0 0
    %196 = vmatpush1.bf16.msra.mxu0 0
    %197 = vmatprep.mubr.bf16.mxu0 0
    %198 = vmatmul.mubr.bf16.gmra.mrb[0].mxu0 %v163
    %v199 = vpop.f32.mrb[0].mxu0
    %v200 = vadd.f32 %v148, %v199
    %v201 = vpop.f32.mrb[0].mxu0
    %v202 = vpop.f32.mrb[0].mxu0
    %v203 = vpop.f32.mrb[0].mxu0
    %204 = vdwg.mxu0
    %v205 = vmul.f32 %v200, 0.2
    %v206 = vmax.f32 %v200, %v205
    %v207 = vpack.c.bf16 %v206, %v206
    %v208 = vld [vmem:[%s5] sm:$0xf]
    %v209 = vld [vmem:[%s5 + $0x4] sm:$0xf]
    %v210 = vld [vmem:[%s5 + $0x8] sm:$0xf]
    %v211 = vld [vmem:[%s5 + $0xc] sm:$0xf]
    %v212 = vld [vmem:[%s6] sm:$0x1]
    %v214 = vlaneseq
    %v215 = vshrl.u32 %v214, 7
    %v216 = vsub.s32 0, %v215
    %v217 = vrot.slane %v212, %v216
    %v223 = vunpack.c.l.b16 %v208
    %v224 = vunpack.c.l.b16 %v209
    %v225 = vunpack.c.l.b16 %v210
    %v226 = vunpack.c.l.b16 %v211
    %v227 = vpack.c.b16 %v224, %v223
    %v228 = vpack.c.b16 %v226, %v225
    %v232 = vsel %vm92, %v207, 0
    %234 = vmatprep.subr.bf16.mxu0 0
    %235 = vmatpush1.bf16.msra.mxu0 %v227
    %236 = vmatprep.subr.bf16.mxu0 0
    %237 = vmatpush1.bf16.msra.mxu0 %v228
    %238 = vmatprep.subr.bf16.mxu0 0
    %239 = vmatpush1.bf16.msra.mxu0 0
    %240 = vmatprep.subr.bf16.mxu0 0
    %241 = vmatpush1.bf16.msra.mxu0 0
    %242 = vmatprep.subr.bf16.mxu0 0
    %243 = vmatpush1.bf16.msra.mxu0 0
    %244 = vmatprep.subr.bf16.mxu0 0
    %245 = vmatpush1.bf16.msra.mxu0 0
    %246 = vmatprep.subr.bf16.mxu0 0
    %247 = vmatpush1.bf16.msra.mxu0 0
    %248 = vmatprep.subr.bf16.mxu0 0
    %249 = vmatpush1.bf16.msra.mxu0 0
    %250 = vmatprep.subr.bf16.mxu0 0
    %251 = vmatpush1.bf16.msra.mxu0 0
    %252 = vmatprep.subr.bf16.mxu0 0
    %253 = vmatpush1.bf16.msra.mxu0 0
    %254 = vmatprep.subr.bf16.mxu0 0
    %255 = vmatpush1.bf16.msra.mxu0 0
    %256 = vmatprep.subr.bf16.mxu0 0
    %257 = vmatpush1.bf16.msra.mxu0 0
    %258 = vmatprep.subr.bf16.mxu0 0
    %259 = vmatpush1.bf16.msra.mxu0 0
    %260 = vmatprep.subr.bf16.mxu0 0
    %261 = vmatpush1.bf16.msra.mxu0 0
    %262 = vmatprep.subr.bf16.mxu0 0
    %263 = vmatpush1.bf16.msra.mxu0 0
    %264 = vmatprep.subr.bf16.mxu0 0
    %265 = vmatpush1.bf16.msra.mxu0 0
    %266 = vmatprep.mubr.bf16.mxu0 0
    %267 = vmatmul.mubr.bf16.gmra.mrb[0].mxu0 %v232
    %v268 = vpop.f32.mrb[0].mxu0
    %v269 = vadd.f32 %v217, %v268
    %v270 = vpop.f32.mrb[0].mxu0
    %v271 = vpop.f32.mrb[0].mxu0
    %v272 = vpop.f32.mrb[0].mxu0
    %273 = vdwg.mxu0
    %v274 = vsub.f32 0.0, %v269
    %v275 = vmul.f32 %v274, 1.442695
    %v276 = vpow.pop %v275
    %v277 = vadd.f32 %v276, 1.0
    %v278 = vrcp.pop %v277
    %v279 = vmul.f32 1.0, %v278
    %vm280 = vcmask 64512
    %281 = vst.msk [vmem:[#allocation8] sm:$0xff] %vm280, %v279
    // Predicated region
    $region42: #{tpu_custom_call.1} parent=1 // pred_check
      _
    $region43: #{tpu_custom_call.1} parent=1 // pred_check_branch
      %283 = sbr.rel (0) target = $region45
    $region44: #{tpu_custom_call.1} parent=1 // pred_region
      %s285 = ssub.s32 128, 128
      %286 = vsyncadd [#allocation4], %s285
      %s288 = sshll.u32 [#allocation8], 4
      %s289 = int_to_ptr.vmem [resolvable:$true] %s288
      %291 = dma.vmem_to_hbm [thread:$0]  %s289, 128, %s7, [#allocation4]
    $region45: #{tpu_custom_call.1} parent=1 // pred_fallthru
      _
    // Predicated region
    $region46: #{tpu_custom_call.1} parent=1 // pred_check
      _
    $region47: #{tpu_custom_call.1} parent=1 // pred_check_branch
      %293 = sbr.rel (0) target = $region49
    $region48: #{tpu_custom_call.1} parent=1 // pred_region
      %294 = dma.done [#allocation4], 128
    $region49: #{tpu_custom_call.1} parent=1 // pred_fallthru
      _
    %295 = vsyncpa [#allocation3], 1
    %296 = vsyncpa [#allocation6], 1
    %297 = vsyncpa [#allocation4], 1

</llo_original>
